<compile_context>
chip_gen: v7x
topology: tpu7x:2x2x1
jax: 0.10.0
libtpu: 0.0.40
codegen_flags: <defaults>
</compile_context>

<pallas_src>
import jax
import jax.numpy as jnp
from jax.experimental import pallas as pl
from jax.experimental.pallas import tpu as pltpu


# ----------------------------------------------------------------------------- kernel

def _conv1x1_kernel(w_ref, x_ref, o_ref):
    # w_ref: [K, C]   x_ref: [C, TILE_N]   o_ref: [K, TILE_N]
    o_ref[...] = jnp.dot(
        w_ref[...], x_ref[...], preferred_element_type=jnp.float32
    ).astype(o_ref.dtype)


# ----------------------------------------------------------------------------- wrapper

def conv1x1_head_pallas(x, w, *, max_tile=2048):
    """1x1x1 Conv3d (no bias).  x: [B, C, H, W, Z], w: [K, C] -> [B, K, H, W, Z]."""
    B, C, H, W, Z = x.shape
    K = w.shape[0]
    N = H * W * Z
    xf = x.reshape(B, C, N)
    w = w.astype(x.dtype)

    # Largest lane-aligned (multiple-of-128) token tile that divides N; fall back to the full
    # extent for small / non-power-of-two N (then the tile equals the array dim, which is legal).
    tile_n = N
    if N > max_tile:
        for cand in (max_tile, 1024, 512, 256, 128):
            if N % cand == 0:
                tile_n = cand
                break

    grid = (B, N // tile_n)

    out = pl.pallas_call(
        _conv1x1_kernel,
        out_shape=jax.ShapeDtypeStruct((B, K, N), x.dtype),
        grid=grid,
        in_specs=[
            pl.BlockSpec((K, C), lambda b, i: (0, 0)),            # weight, VMEM-resident
            pl.BlockSpec((None, C, tile_n), lambda b, i: (b, 0, i)),
        ],
        out_specs=pl.BlockSpec((None, K, tile_n), lambda b, i: (b, 0, i)),
        compiler_params=pltpu.CompilerParams(
            dimension_semantics=("parallel", "parallel")),
    )(w, xf)
    return out.reshape(B, K, H, W, Z)


def pred_head_forward(params, x_32, x_64, x_128, x_256):
    """Matches PredHead.forward: returns (x_32, x_64, x_128, x_256) logits."""
    y_256 = conv1x1_head_pallas(x_256, params["w_256"])
    y_128 = conv1x1_head_pallas(x_128, params["w_128"])
    y_64 = conv1x1_head_pallas(x_64, params["w_64"])
    y_32 = conv1x1_head_pallas(x_32, params["w_32"])
    return (y_32, y_64, y_128, y_256)


# ----------------------------------------------------------------------------- params + reference

def init_params(key, geo_feat_channels, num_class):
    ks = jax.random.split(key, 4)
    scale = 1.0 / (geo_feat_channels ** 0.5)

    def w(k):
        # torch Conv3d weight is [K, C, 1, 1, 1]; kernel-size-1 conv uses only the [K, C] slab.
        return jax.random.uniform(k, (num_class, geo_feat_channels), jnp.float32,
                                  minval=-scale, maxval=scale)

    return dict(w_32=w(ks[0]), w_64=w(ks[1]), w_128=w(ks[2]), w_256=w(ks[3]))


def _conv1x1_ref(x, w):
    return jnp.einsum("bchwz,kc->bkhwz", x, w, precision=jax.lax.Precision.HIGHEST)


def forward_reference(params, x_32, x_64, x_128, x_256):
    return (
        _conv1x1_ref(x_32, params["w_32"]),
        _conv1x1_ref(x_64, params["w_64"]),
        _conv1x1_ref(x_128, params["w_128"]),
        _conv1x1_ref(x_256, params["w_256"]),
    )


# ----------------------------------------------------------------------------- main

if __name__ == "__main__":
    GEO_C = 32       # geo_feat_channels
    NUM_CLASS = 20   # num_class
    B = 2

    key = jax.random.PRNGKey(0)
    kp, k32, k64, k128, k256 = jax.random.split(key, 5)
    params = init_params(kp, GEO_C, NUM_CLASS)

    # Small stand-ins for the 32^3 / 64^3 / 128^3 / 256^3 multi-scale voxel grids.
    x_32 = jax.random.normal(k32, (B, GEO_C, 4, 4, 4), jnp.float32)
    x_64 = jax.random.normal(k64, (B, GEO_C, 8, 8, 8), jnp.float32)
    x_128 = jax.random.normal(k128, (B, GEO_C, 16, 16, 16), jnp.float32)
    x_256 = jax.random.normal(k256, (B, GEO_C, 32, 32, 32), jnp.float32)

    outs = pred_head_forward(params, x_32, x_64, x_128, x_256)
    outs = jax.block_until_ready(outs)

    refs = jax.block_until_ready(forward_reference(params, x_32, x_64, x_128, x_256))

    expected_shapes = [
        (B, NUM_CLASS, 4, 4, 4),
        (B, NUM_CLASS, 8, 8, 8),
        (B, NUM_CLASS, 16, 16, 16),
        (B, NUM_CLASS, 32, 32, 32),
    ]
    for o, r, es in zip(outs, refs, expected_shapes):
        assert o.shape == es, (o.shape, es)
        max_err = float(jnp.max(jnp.abs(o - r)))
        assert max_err < 5e-3, f"max abs error {max_err} for shape {es}"

    print("KERNEL_OK")
</pallas_src>

<mosaic_0001>
module attributes {stable_mosaic.version = 11 : i64} {
  func.func @_conv1x1_kernel(%arg0: i32, %arg1: i32, %arg2: memref<20x32xf32, #tpu.memory_space<vmem>>, %arg3: memref<1x32x2048xf32, #tpu.memory_space<vmem>>, %arg4: memref<1x20x2048xf32, #tpu.memory_space<vmem>>) attributes {dimension_semantics = [#tpu.dimension_semantics<parallel>, #tpu.dimension_semantics<parallel>], iteration_bounds = array<i64: 2, 16>, scalar_prefetch = 0 : i64, scratch_operands = 0 : i64, tpu.core_type = #tpu.core_type<tc>, window_params = [{pipeline_mode = #tpu.pipeline_mode<synchronous>, transform_indices = @transform_0, window_bounds = array<i64: 20, 32>}, {transform_indices = @transform_1, window_bounds = array<i64: 1, 32, 2048>}, {transform_indices = @transform_2, window_bounds = array<i64: 1, 20, 2048>}]} {
    %c0 = arith.constant 0 : index
    %c0_0 = arith.constant 0 : index
    %0 = vector.load %arg2[%c0, %c0_0] : memref<20x32xf32, #tpu.memory_space<vmem>>, vector<20x32xf32>
    %c0_1 = arith.constant 0 : index
    %c0_2 = arith.constant 0 : index
    %c0_3 = arith.constant 0 : index
    %1 = vector.load %arg3[%c0_1, %c0_2, %c0_3] : memref<1x32x2048xf32, #tpu.memory_space<vmem>>, vector<1x32x2048xf32>
    %2 = vector.shape_cast %1 : vector<1x32x2048xf32> to vector<32x2048xf32>
    %cst = arith.constant dense<0.000000e+00> : vector<20x2048xf32>
    %3 = tpu.matmul %0, %2, %cst {dimension_numbers = #tpu.dot_dimension_numbers<[1], [0], [0], [1], [0, 0, 1, 1], [], []>} : vector<20x32xf32>, vector<32x2048xf32>, vector<20x2048xf32> -> vector<20x2048xf32>
    %c0_4 = arith.constant 0 : index
    %c0_5 = arith.constant 0 : index
    %c0_6 = arith.constant 0 : index
    %4 = vector.load %arg4[%c0_4, %c0_5, %c0_6] : memref<1x20x2048xf32, #tpu.memory_space<vmem>>, vector<1x20x2048xf32>
    %5 = vector.shape_cast %4 : vector<1x20x2048xf32> to vector<20x2048xf32>
    %6 = vector.shape_cast %3 : vector<20x2048xf32> to vector<1x20x2048xf32>
    tpu.vector_store %arg4[%c0_4, %c0_5, %c0_6], %6 {strides = array<i32>} : memref<1x20x2048xf32, #tpu.memory_space<vmem>>, vector<1x20x2048xf32>,
    return
  }
  func.func @transform_0(%arg0: i32, %arg1: i32) -> (i32, i32) {
    %c0_i32 = arith.constant 0 : i32
    %c0_i32_0 = arith.constant 0 : i32
    %c0_i32_1 = arith.constant 0 : i32
    return %c0_i32, %c0_i32_0 : i32, i32
  }
  func.func @transform_1(%arg0: i32, %arg1: i32) -> (i32, i32, i32) {
    %c0_i32 = arith.constant 0 : i32
    %c0_i32_0 = arith.constant 0 : i32
    return %arg0, %c0_i32, %arg1 : i32, i32, i32
  }
  func.func @transform_2(%arg0: i32, %arg1: i32) -> (i32, i32, i32) {
    %c0_i32 = arith.constant 0 : i32
    %c0_i32_0 = arith.constant 0 : i32
    return %arg0, %c0_i32, %arg1 : i32, i32, i32
  }
}

</mosaic_0001>

<llo_original>
// kernel: tpu_custom_call.1
$region0: #{tpu_custom_call.1}
  #allocation0 [shape = 'u32[]', space=smem, size = 0x4, offset = 0x4, fixed_abs, tag = 'smem constant byte address 0x4 - core index']
  #allocation1 [shape = 'u32[144,128]{1,0:T(1,128)}', space=vmem, size = 0x12000, scoped, tag = 'internal scratch']
  %s0 = inlined_call_operand.hbm [shape: f32[20,32], index: 0, kind: input, shape index: {}]
  %s1 = inlined_call_operand.hbm [shape: f32[2,32,32768], index: 1, kind: input, shape index: {}]
  %s2 = inlined_call_operand.vmem [shape: f32[2,20,32768], index: 2, kind: output, shape index: {}]
  %s3 = sld [smem:[#allocation0]]
  $region68: #{tpu_custom_call.1} parent=0
    _
  %s5 = ssub.s32 1, %s3
  %s6 = scalar_select 0, %s5, %s3
  $region1: #{tpu_custom_call.1} parent=0
    #allocation2 [shape = 'u8[12288]{0}', space=vmem, size = 0x3000, scoped, tag = 'input window, operand 0, single buffered']
    #allocation3 [shape = 's32[2]{0}', space=sflag, size = 0x8, scoped, tag = 'scoped memory for tpu_custom_call.1']
    #allocation4 [shape = 'u8[524288]{0}', space=vmem, size = 0x80000, scoped, tag = 'input window, operand 1']
    #allocation5 [shape = 's32[2]{0}', space=sflag, size = 0x8, scoped, tag = 'scoped memory for tpu_custom_call.1']
    #allocation6 [shape = 'u8[393216]{0}', space=vmem, size = 0x60000, scoped, tag = 'output window, operand 0']
    %7 = vsyncpa [#allocation3], 0
    %8 = vsyncpa [#allocation5], 0
    %s9 = scalar_lea.sflag [#allocation5], 1
    %10 = vsyncpa %s9, 0
    loop: start=0, step=1, limit=34
    $region2: #{tpu_custom_call.1} parent=1 // loop_pre_header
      _
    $region3: #{tpu_custom_call.1} parent=1 // loop_header
      %s12 = sphi 0, %s16
      %p13 = scmp.ge.s32.totalorder %s12, 34
      %s19 = sphi 0, %s31
      %s20 = sphi 0, %s27
      %s21 = sphi 0, %s19
      %s22 = sphi 0, %s20
      %s23 = sphi 0, %s21
      %s24 = sphi 0, %s22
      %s32 = sphi 0, %s32
      %s34 = sphi 0, %s32
      %s35 = sphi 0, %s34
      %s49 = sphi 0, %s35
      %s57 = sphi 0, %s59
      %s60 = sphi 0, %s57
      %s61 = sphi 0, %s60
      %s77 = sphi 0, %s61
      %s85 = sphi 0, %s87
      %s88 = sphi 0, %s85
      %s89 = sphi 0, %s88
      %s105 = sphi 0, %s89
    $region4: #{tpu_custom_call.1} parent=1 // loop_header_branch
      %15 = sbr.rel (%p13) target = $region8
    $region5: #{tpu_custom_call.1} parent=1 // loop_body
      %s17 = ssub.s32 %s12, 1
      %s18 = ssub.s32 %s12, 2
      %s25 = sadd.s32 1, %s20
      %p26 = scmp.ge.s32.totalorder %s25, 16
      %s27 = scalar_select %p26, 0, %s25
      %s28 = sadd.s32 1, %s19
      %s29 = scalar_select %p26, %s28, %s19
      %p30 = scmp.ge.s32.totalorder %s29, 2
      %s31 = scalar_select %p30, 0, %s29
      %s33 = sadd.s32 %s32, 1
      %p36 = scmp.eq.s32.totalorder %s12, 31
      %p37 = scmp.ne.s32.totalorder %s32, %s34
      %p38 = scmp.eq.s32.totalorder %s12, 0
      %p39 = por %p37, %p38
      %p40 = scmp.ne.s32.totalorder %s32, %s34
      %p41 = scmp.eq.s32.totalorder %s17, 31
      %p42 = por %p40, %p41
      %p43 = scmp.ne.s32.totalorder %s34, %s35
      %p44 = scmp.eq.s32.totalorder %s17, 0
      %p45 = por %p43, %p44
      %p46 = scmp.ne.s32.totalorder %s34, %s35
      %p47 = scmp.eq.s32.totalorder %s18, 31
      %p48 = por %p46, %p47
      %p50 = scmp.ne.s32.totalorder %s35, %s49
      %p51 = scmp.eq.s32.totalorder %s18, 0
      %p52 = por %p50, %p51
      %s53 = ssub.s32 %s19, %s31
      %s54 = ssub.s32 %s20, %s27
      %s55 = sor.u32 %s53, %s54
      %p56 = scmp.eq.s32.totalorder %s55, 0
      %s58 = sadd.s32 %s57, 1
      %s59 = scalar_select %p56, %s57, %s58
      %p62 = pneg %p56
      %p63 = scmp.eq.s32.totalorder %s12, 31
      %p64 = por %p62, %p63
      %p65 = scmp.ne.s32.totalorder %s57, %s60
      %p66 = scmp.eq.s32.totalorder %s12, 0
      %p67 = por %p65, %p66
      %p68 = scmp.ne.s32.totalorder %s57, %s60
      %p69 = scmp.eq.s32.totalorder %s17, 31
      %p70 = por %p68, %p69
      %p71 = scmp.ne.s32.totalorder %s60, %s61
      %p72 = scmp.eq.s32.totalorder %s17, 0
      %p73 = por %p71, %p72
      %p74 = scmp.ne.s32.totalorder %s60, %s61
      %p75 = scmp.eq.s32.totalorder %s18, 31
      %p76 = por %p74, %p75
      %p78 = scmp.ne.s32.totalorder %s61, %s77
      %p79 = scmp.eq.s32.totalorder %s18, 0
      %p80 = por %p78, %p79
      %s81 = ssub.s32 %s19, %s31
      %s82 = ssub.s32 %s20, %s27
      %s83 = sor.u32 %s81, %s82
      %p84 = scmp.eq.s32.totalorder %s83, 0
      %s86 = sadd.s32 %s85, 1
      %s87 = scalar_select %p84, %s85, %s86
      %p90 = pneg %p84
      %p91 = scmp.eq.s32.totalorder %s12, 31
      %p92 = por %p90, %p91
      %p93 = scmp.ne.s32.totalorder %s85, %s88
      %p94 = scmp.eq.s32.totalorder %s12, 0
      %p95 = por %p93, %p94
      %p96 = scmp.ne.s32.totalorder %s85, %s88
      %p97 = scmp.eq.s32.totalorder %s17, 31
      %p98 = por %p96, %p97
      %p99 = scmp.ne.s32.totalorder %s88, %s89
      %p100 = scmp.eq.s32.totalorder %s17, 0
      %p101 = por %p99, %p100
      %p102 = scmp.ne.s32.totalorder %s88, %s89
      %p103 = scmp.eq.s32.totalorder %s18, 31
      %p104 = por %p102, %p103
      %p106 = scmp.ne.s32.totalorder %s89, %s105
      %p107 = scmp.eq.s32.totalorder %s18, 0
      %p108 = por %p106, %p107
      %p109 = scmp.le.s32.totalorder 1, %s12
      %p110 = scmp.lt.s32.totalorder %s12, 33
      %p111 = pnand %p109, %p110
      %p112 = pneg %p111
      // Predicated region
      $region9: #{tpu_custom_call.1} parent=5 // pred_check
        _
      $region10: #{tpu_custom_call.1} parent=5 // pred_check_branch
        %114 = sbr.rel (%p111) target = $region12
      $region11: #{tpu_custom_call.1} parent=5 // pred_region
        %s115 = ssub.s32 %s12, 1
        // Predicated region
        $region13: #{tpu_custom_call.1} parent=11 // pred_check
          %p116 = pneg %p45
        $region14: #{tpu_custom_call.1} parent=11 // pred_check_branch
          %118 = sbr.rel (%p116) target = $region16
        $region15: #{tpu_custom_call.1} parent=11 // pred_region
          %s120 = ssub.s32 384, 384
          %121 = vsyncadd [#allocation3], %s120
          %s122 = sshll.u32 [#allocation2], 4
          %s123 = int_to_ptr.vmem [resolvable:$true] %s122
          %128 = dma.hbm_to_vmem [thread:$0]  %s0, 384, %s123, [#allocation3], 128, 128, 8
        $region16: #{tpu_custom_call.1} parent=11 // pred_fallthru
          _
      $region12: #{tpu_custom_call.1} parent=5 // pred_fallthru
        _
      %p129 = scmp.lt.s32.totalorder %s12, 32
      // Predicated region
      $region17: #{tpu_custom_call.1} parent=5 // pred_check
        %p130 = pneg %p129
      $region18: #{tpu_custom_call.1} parent=5 // pred_check_branch
        %132 = sbr.rel (%p130) target = $region20
      $region19: #{tpu_custom_call.1} parent=5 // pred_region
        // Predicated region
        $region21: #{tpu_custom_call.1} parent=19 // pred_check
          %p133 = pneg %p67
        $region22: #{tpu_custom_call.1} parent=19 // pred_check_branch
          %135 = sbr.rel (%p133) target = $region24
        $region23: #{tpu_custom_call.1} parent=19 // pred_region
          %s136 = sand.u32 %s57, 1
          %s137 = scalar_lea.sflag [#allocation5], %s136
          %s138 = sand.u32 %s57, 1
          %s139 = smul.addr %s138, 512
          %s140 = scalar_lea.vmem [#allocation4], %s139
          %s141 = smul.u32 16, %s20
          %s143 = ssub.s32 8192, 8192
          %144 = vsyncadd %s137, %s143
          %s145 = smul.addr %s19, 1024
          %s146 = sadd.s32 %s141, %s145
          %s147 = smul.addr %s146, 128
          %s148 = scalar_lea.hbm %s1, %s147
          %s149 = sshll.u32 %s140, 4
          %s150 = int_to_ptr.vmem [resolvable:$true] %s149
          %155 = dma.hbm_to_vmem [thread:$0]  %s148, 8192, %s150, %s137, 32768, 2048, 128
        $region24: #{tpu_custom_call.1} parent=19 // pred_fallthru
          _
      $region20: #{tpu_custom_call.1} parent=5 // pred_fallthru
        _
      %p156 = scmp.le.s32.totalorder 1, %s12
      %p157 = scmp.lt.s32.totalorder %s12, 33
      %p158 = pnand %p156, %p157
      %p159 = pneg %p158
      // Predicated region
      $region25: #{tpu_custom_call.1} parent=5 // pred_check
        _
      $region26: #{tpu_custom_call.1} parent=5 // pred_check_branch
        %161 = sbr.rel (%p158) target = $region28
      $region27: #{tpu_custom_call.1} parent=5 // pred_region
        %s162 = ssub.s32 %s12, 1
        // Predicated region
        $region29: #{tpu_custom_call.1} parent=27 // pred_check
          %p163 = pneg %p45
        $region30: #{tpu_custom_call.1} parent=27 // pred_check_branch
          %165 = sbr.rel (%p163) target = $region32
        $region31: #{tpu_custom_call.1} parent=27 // pred_region
          %166 = dma.done [#allocation3], 384
        $region32: #{tpu_custom_call.1} parent=27 // pred_fallthru
          _
        %s167 = sand.u32 %s60, 1
        %s168 = scalar_lea.sflag [#allocation5], %s167
        %s169 = sand.u32 %s60, 1
        %s170 = smul.addr %s169, 512
        %s171 = scalar_lea.vmem [#allocation4], %s170
        // Predicated region
        $region33: #{tpu_custom_call.1} parent=27 // pred_check
          %p172 = pneg %p73
        $region34: #{tpu_custom_call.1} parent=27 // pred_check_branch
          %174 = sbr.rel (%p172) target = $region36
        $region35: #{tpu_custom_call.1} parent=27 // pred_region
          %175 = dma.done %s168, 8192
        $region36: #{tpu_custom_call.1} parent=27 // pred_fallthru
          _
        %p176 = pneg %p45
        %p177 = pneg %p42
        %s178 = sand.u32 %s60, 1
        %s179 = scalar_lea.sflag [#allocation5], %s178
        %s180 = sand.u32 %s60, 1
        %s181 = smul.addr %s180, 512
        %s182 = scalar_lea.vmem [#allocation4], %s181
        %p183 = pneg %p73
        %p184 = pneg %p70
        %p185 = pneg %p101
        %p186 = pneg %p98
        %s187 = sand.u32 %s88, 1
        %s188 = sand.u32 %s88, 1
        %s189 = smul.addr %s188, 384
        %s190 = scalar_lea.vmem [#allocation6], %s189
        %s191 = smul.u32 16, %s22
        %s192 = smul.u32 16, %s22
        %v193 = vld [vmem:[#allocation2] sm:$0xff]
        %v194 = vld [vmem:[#allocation2 + $0x8] sm:$0xff]
        %v195 = vld [vmem:[#allocation2 + $0x10] sm:$0xf]
        %v196 = vld [vmem:[%s171] sm:$0xff]
        %v197 = vld [vmem:[%s171 + $0x8] sm:$0xff]
        %v198 = vld [vmem:[%s171 + $0x10] sm:$0xff]
        %v199 = vld [vmem:[%s171 + $0x18] sm:$0xff]
        %v200 = vld [vmem:[%s171 + $0x20] sm:$0xff]
        %v201 = vld [vmem:[%s171 + $0x28] sm:$0xff]
        %v202 = vld [vmem:[%s171 + $0x30] sm:$0xff]
        %v203 = vld [vmem:[%s171 + $0x38] sm:$0xff]
        %v204 = vld [vmem:[%s171 + $0x40] sm:$0xff]
        %v205 = vld [vmem:[%s171 + $0x48] sm:$0xff]
        %v206 = vld [vmem:[%s171 + $0x50] sm:$0xff]
        %v207 = vld [vmem:[%s171 + $0x58] sm:$0xff]
        %v208 = vld [vmem:[%s171 + $0x60] sm:$0xff]
        %v209 = vld [vmem:[%s171 + $0x68] sm:$0xff]
        %v210 = vld [vmem:[%s171 + $0x70] sm:$0xff]
        %v211 = vld [vmem:[%s171 + $0x78] sm:$0xff]
        %v212 = vld [vmem:[%s171 + $0x80] sm:$0xff]
        %v213 = vld [vmem:[%s171 + $0x88] sm:$0xff]
        %v214 = vld [vmem:[%s171 + $0x90] sm:$0xff]
        %v215 = vld [vmem:[%s171 + $0x98] sm:$0xff]
        %v216 = vld [vmem:[%s171 + $0xa0] sm:$0xff]
        %v217 = vld [vmem:[%s171 + $0xa8] sm:$0xff]
        %v218 = vld [vmem:[%s171 + $0xb0] sm:$0xff]
        %v219 = vld [vmem:[%s171 + $0xb8] sm:$0xff]
        %v220 = vld [vmem:[%s171 + $0xc0] sm:$0xff]
        %v221 = vld [vmem:[%s171 + $0xc8] sm:$0xff]
        %v222 = vld [vmem:[%s171 + $0xd0] sm:$0xff]
        %v223 = vld [vmem:[%s171 + $0xd8] sm:$0xff]
        %v224 = vld [vmem:[%s171 + $0xe0] sm:$0xff]
        %v225 = vld [vmem:[%s171 + $0xe8] sm:$0xff]
        %v226 = vld [vmem:[%s171 + $0xf0] sm:$0xff]
        %v227 = vld [vmem:[%s171 + $0xf8] sm:$0xff]
        %v228 = vld [vmem:[%s171 + $0x100] sm:$0xff]
        %v229 = vld [vmem:[%s171 + $0x108] sm:$0xff]
        %v230 = vld [vmem:[%s171 + $0x110] sm:$0xff]
        %v231 = vld [vmem:[%s171 + $0x118] sm:$0xff]
        %v232 = vld [vmem:[%s171 + $0x120] sm:$0xff]
        %v233 = vld [vmem:[%s171 + $0x128] sm:$0xff]
        %v234 = vld [vmem:[%s171 + $0x130] sm:$0xff]
        %v235 = vld [vmem:[%s171 + $0x138] sm:$0xff]
        %v236 = vld [vmem:[%s171 + $0x140] sm:$0xff]
        %v237 = vld [vmem:[%s171 + $0x148] sm:$0xff]
        %v238 = vld [vmem:[%s171 + $0x150] sm:$0xff]
        %v239 = vld [vmem:[%s171 + $0x158] sm:$0xff]
        %v240 = vld [vmem:[%s171 + $0x160] sm:$0xff]
        %v241 = vld [vmem:[%s171 + $0x168] sm:$0xff]
        %v242 = vld [vmem:[%s171 + $0x170] sm:$0xff]
        %v243 = vld [vmem:[%s171 + $0x178] sm:$0xff]
        %v244 = vld [vmem:[%s171 + $0x180] sm:$0xff]
        %v245 = vld [vmem:[%s171 + $0x188] sm:$0xff]
        %v246 = vld [vmem:[%s171 + $0x190] sm:$0xff]
        %v247 = vld [vmem:[%s171 + $0x198] sm:$0xff]
        %v248 = vld [vmem:[%s171 + $0x1a0] sm:$0xff]
        %v249 = vld [vmem:[%s171 + $0x1a8] sm:$0xff]
        %v250 = vld [vmem:[%s171 + $0x1b0] sm:$0xff]
        %v251 = vld [vmem:[%s171 + $0x1b8] sm:$0xff]
        %v252 = vld [vmem:[%s171 + $0x1c0] sm:$0xff]
        %v253 = vld [vmem:[%s171 + $0x1c8] sm:$0xff]
        %v254 = vld [vmem:[%s171 + $0x1d0] sm:$0xff]
        %v255 = vld [vmem:[%s171 + $0x1d8] sm:$0xff]
        %v256 = vld [vmem:[%s171 + $0x1e0] sm:$0xff]
        %v257 = vld [vmem:[%s171 + $0x1e8] sm:$0xff]
        %v258 = vld [vmem:[%s171 + $0x1f0] sm:$0xff]
        %v259 = vld [vmem:[%s171 + $0x1f8] sm:$0xff]
        %vm260 = vcmask 261120
        %v262 = vsel %vm260, %v193, 0
        %v265 = vsel %vm260, %v194, 0
        %v268 = vsel %vm260, %v195, 0
        %270 = vmatprep.subr.mxu0 %v197
        %271 = vmatpush1.msra.mxu0 %v196
        %272 = vmatprep.subr.mxu0 %v213
        %273 = vmatpush1.msra.mxu0 %v212
        %274 = vmatprep.subr.mxu0 %v229
        %275 = vmatpush1.msra.mxu0 %v228
        %276 = vmatprep.subr.mxu0 %v245
        %277 = vmatpush1.msra.mxu0 %v244
        %278 = vmatprep.subr.mxu0 0.0
        %279 = vmatpush1.msra.mxu0 0.0
        %280 = vmatprep.subr.mxu0 0.0
        %281 = vmatpush1.msra.mxu0 0.0
        %282 = vmatprep.subr.mxu0 0.0
        %283 = vmatpush1.msra.mxu0 0.0
        %284 = vmatprep.subr.mxu0 0.0
        %285 = vmatpush1.msra.mxu0 0.0
        %286 = vmatprep.subr.mxu0 0.0
        %287 = vmatpush1.msra.mxu0 0.0
        %288 = vmatprep.subr.mxu0 0.0
        %289 = vmatpush1.msra.mxu0 0.0
        %290 = vmatprep.subr.mxu0 0.0
        %291 = vmatpush1.msra.mxu0 0.0
        %292 = vmatprep.subr.mxu0 0.0
        %293 = vmatpush1.msra.mxu0 0.0
        %294 = vmatprep.subr.mxu0 0.0
        %295 = vmatpush1.msra.mxu0 0.0
        %296 = vmatprep.subr.mxu0 0.0
        %297 = vmatpush1.msra.mxu0 0.0
        %298 = vmatprep.subr.mxu0 0.0
        %299 = vmatpush1.msra.mxu0 0.0
        %300 = vmatprep.subr.mxu0 0.0
        %301 = vmatpush1.msra.mxu0 0.0
        %302 = vmatprep.subr.mxu0 0.0
        %303 = vmatpush1.msra.mxu0 0.0
        %304 = vmatprep.subr.mxu0 0.0
        %305 = vmatpush1.msra.mxu0 0.0
        %306 = vmatprep.subr.mxu0 0.0
        %307 = vmatpush1.msra.mxu0 0.0
        %308 = vmatprep.subr.mxu0 0.0
        %309 = vmatpush1.msra.mxu0 0.0
        %310 = vmatprep.subr.mxu0 0.0
        %311 = vmatpush1.msra.mxu0 0.0
        %312 = vmatprep.subr.mxu0 0.0
        %313 = vmatpush1.msra.mxu0 0.0
        %314 = vmatprep.subr.mxu0 0.0
        %315 = vmatpush1.msra.mxu0 0.0
        %316 = vmatprep.subr.mxu0 0.0
        %317 = vmatpush1.msra.mxu0 0.0
        %318 = vmatprep.subr.mxu0 0.0
        %319 = vmatpush1.msra.mxu0 0.0
        %320 = vmatprep.subr.mxu0 0.0
        %321 = vmatpush1.msra.mxu0 0.0
        %322 = vmatprep.subr.mxu0 0.0
        %323 = vmatpush1.msra.mxu0 0.0
        %324 = vmatprep.subr.mxu0 0.0
        %325 = vmatpush1.msra.mxu0 0.0
        %326 = vmatprep.subr.mxu0 0.0
        %327 = vmatpush1.msra.mxu0 0.0
        %328 = vmatprep.subr.mxu0 0.0
        %329 = vmatpush1.msra.mxu0 0.0
        %330 = vmatprep.subr.mxu0 0.0
        %331 = vmatpush1.msra.mxu0 0.0
        %332 = vmatprep.subr.mxu0 0.0
        %333 = vmatpush1.msra.mxu0 0.0
        %334 = vmatprep.mubr.f32.mxu0 0.0
        %335 = vmatmul.mubr.f32.gmra.mrb[0].mxu0 %v262
        %v336 = vpop.f32.mrb[0].mxu0
        %v337 = vadd.f32 0.0, %v336
        %v338 = vpop.f32.mrb[0].mxu0
        %v339 = vadd.f32 0.0, %v338
        %340 = vmatprep.mubr.f32.mxu0 0.0
        %341 = vmatmul.mubr.f32.gmra.mrb[0].mxu0 %v265
        %v342 = vpop.f32.mrb[0].mxu0
        %v343 = vadd.f32 0.0, %v342
        %v344 = vpop.f32.mrb[0].mxu0
        %v345 = vadd.f32 0.0, %v344
        %346 = vmatprep.mubr.f32.mxu0 0.0
        %347 = vmatmul.mubr.f32.gmra.mrb[0].mxu0 %v268
        %v348 = vpop.f32.mrb[0].mxu0
        %v349 = vadd.f32 0.0, %v348
        %v350 = vpop.f32.mrb[0].mxu0
        %v351 = vadd.f32 0.0, %v350
        %352 = vdwg.mxu0
        %353 = vmatprep.subr.mxu0 %v199
        %354 = vmatpush1.msra.mxu0 %v198
        %355 = vmatprep.subr.mxu0 %v215
        %356 = vmatpush1.msra.mxu0 %v214
        %357 = vmatprep.subr.mxu0 %v231
        %358 = vmatpush1.msra.mxu0 %v230
        %359 = vmatprep.subr.mxu0 %v247
        %360 = vmatpush1.msra.mxu0 %v246
        %361 = vmatprep.subr.mxu0 0.0
        %362 = vmatpush1.msra.mxu0 0.0
        %363 = vmatprep.subr.mxu0 0.0
        %364 = vmatpush1.msra.mxu0 0.0
        %365 = vmatprep.subr.mxu0 0.0
        %366 = vmatpush1.msra.mxu0 0.0
        %367 = vmatprep.subr.mxu0 0.0
        %368 = vmatpush1.msra.mxu0 0.0
        %369 = vmatprep.subr.mxu0 0.0
        %370 = vmatpush1.msra.mxu0 0.0
        %371 = vmatprep.subr.mxu0 0.0
        %372 = vmatpush1.msra.mxu0 0.0
        %373 = vmatprep.subr.mxu0 0.0
        %374 = vmatpush1.msra.mxu0 0.0
        %375 = vmatprep.subr.mxu0 0.0
        %376 = vmatpush1.msra.mxu0 0.0
        %377 = vmatprep.subr.mxu0 0.0
        %378 = vmatpush1.msra.mxu0 0.0
        %379 = vmatprep.subr.mxu0 0.0
        %380 = vmatpush1.msra.mxu0 0.0
        %381 = vmatprep.subr.mxu0 0.0
        %382 = vmatpush1.msra.mxu0 0.0
        %383 = vmatprep.subr.mxu0 0.0
        %384 = vmatpush1.msra.mxu0 0.0
        %385 = vmatprep.subr.mxu0 0.0
        %386 = vmatpush1.msra.mxu0 0.0
        %387 = vmatprep.subr.mxu0 0.0
        %388 = vmatpush1.msra.mxu0 0.0
        %389 = vmatprep.subr.mxu0 0.0
        %390 = vmatpush1.msra.mxu0 0.0
        %391 = vmatprep.subr.mxu0 0.0
        %392 = vmatpush1.msra.mxu0 0.0
        %393 = vmatprep.subr.mxu0 0.0
        %394 = vmatpush1.msra.mxu0 0.0
        %395 = vmatprep.subr.mxu0 0.0
        %396 = vmatpush1.msra.mxu0 0.0
        %397 = vmatprep.subr.mxu0 0.0
        %398 = vmatpush1.msra.mxu0 0.0
        %399 = vmatprep.subr.mxu0 0.0
        %400 = vmatpush1.msra.mxu0 0.0
        %401 = vmatprep.subr.mxu0 0.0
        %402 = vmatpush1.msra.mxu0 0.0
        %403 = vmatprep.subr.mxu0 0.0
        %404 = vmatpush1.msra.mxu0 0.0
        %405 = vmatprep.subr.mxu0 0.0
        %406 = vmatpush1.msra.mxu0 0.0
        %407 = vmatprep.subr.mxu0 0.0
        %408 = vmatpush1.msra.mxu0 0.0
        %409 = vmatprep.subr.mxu0 0.0
        %410 = vmatpush1.msra.mxu0 0.0
        %411 = vmatprep.subr.mxu0 0.0
        %412 = vmatpush1.msra.mxu0 0.0
        %413 = vmatprep.subr.mxu0 0.0
        %414 = vmatpush1.msra.mxu0 0.0
        %415 = vmatprep.subr.mxu0 0.0
        %416 = vmatpush1.msra.mxu0 0.0
        %417 = vmatprep.mubr.f32.mxu0 0.0
        %418 = vmatmul.mubr.f32.gmra.mrb[0].mxu0 %v262
        %v419 = vpop.f32.mrb[0].mxu0
        %v420 = vadd.f32 0.0, %v419
        %v421 = vpop.f32.mrb[0].mxu0
        %v422 = vadd.f32 0.0, %v421
        %423 = vmatprep.mubr.f32.mxu0 0.0
        %424 = vmatmul.mubr.f32.gmra.mrb[0].mxu0 %v265
        %v425 = vpop.f32.mrb[0].mxu0
        %v426 = vadd.f32 0.0, %v425
        %v427 = vpop.f32.mrb[0].mxu0
        %v428 = vadd.f32 0.0, %v427
        %429 = vmatprep.mubr.f32.mxu0 0.0
        %430 = vmatmul.mubr.f32.gmra.mrb[0].mxu0 %v268
        %v431 = vpop.f32.mrb[0].mxu0
        %v432 = vadd.f32 0.0, %v431
        %v433 = vpop.f32.mrb[0].mxu0
        %v434 = vadd.f32 0.0, %v433
        %435 = vdwg.mxu0
        %436 = vmatprep.subr.mxu0 %v201
        %437 = vmatpush1.msra.mxu0 %v200
        %438 = vmatprep.subr.mxu0 %v217
        %439 = vmatpush1.msra.mxu0 %v216
        %440 = vmatprep.subr.mxu0 %v233
        %441 = vmatpush1.msra.mxu0 %v232
        %442 = vmatprep.subr.mxu0 %v249
        %443 = vmatpush1.msra.mxu0 %v248
        %444 = vmatprep.subr.mxu0 0.0
        %445 = vmatpush1.msra.mxu0 0.0
        %446 = vmatprep.subr.mxu0 0.0
        %447 = vmatpush1.msra.mxu0 0.0
        %448 = vmatprep.subr.mxu0 0.0
        %449 = vmatpush1.msra.mxu0 0.0
        %450 = vmatprep.subr.mxu0 0.0
        %451 = vmatpush1.msra.mxu0 0.0
        %452 = vmatprep.subr.mxu0 0.0
        %453 = vmatpush1.msra.mxu0 0.0
        %454 = vmatprep.subr.mxu0 0.0
        %455 = vmatpush1.msra.mxu0 0.0
        %456 = vmatprep.subr.mxu0 0.0
        %457 = vmatpush1.msra.mxu0 0.0
        %458 = vmatprep.subr.mxu0 0.0
        %459 = vmatpush1.msra.mxu0 0.0
        %460 = vmatprep.subr.mxu0 0.0
        %461 = vmatpush1.msra.mxu0 0.0
        %462 = vmatprep.subr.mxu0 0.0
        %463 = vmatpush1.msra.mxu0 0.0
        %464 = vmatprep.subr.mxu0 0.0
        %465 = vmatpush1.msra.mxu0 0.0
        %466 = vmatprep.subr.mxu0 0.0
        %467 = vmatpush1.msra.mxu0 0.0
        %468 = vmatprep.subr.mxu0 0.0
        %469 = vmatpush1.msra.mxu0 0.0
        %470 = vmatprep.subr.mxu0 0.0
        %471 = vmatpush1.msra.mxu0 0.0
        %472 = vmatprep.subr.mxu0 0.0
        %473 = vmatpush1.msra.mxu0 0.0
        %474 = vmatprep.subr.mxu0 0.0
        %475 = vmatpush1.msra.mxu0 0.0
        %476 = vmatprep.subr.mxu0 0.0
        %477 = vmatpush1.msra.mxu0 0.0
        %478 = vmatprep.subr.mxu0 0.0
        %479 = vmatpush1.msra.mxu0 0.0
        %480 = vmatprep.subr.mxu0 0.0
        %481 = vmatpush1.msra.mxu0 0.0
        %482 = vmatprep.subr.mxu0 0.0
        %483 = vmatpush1.msra.mxu0 0.0
        %484 = vmatprep.subr.mxu0 0.0
        %485 = vmatpush1.msra.mxu0 0.0
        %486 = vmatprep.subr.mxu0 0.0
        %487 = vmatpush1.msra.mxu0 0.0
        %488 = vmatprep.subr.mxu0 0.0
        %489 = vmatpush1.msra.mxu0 0.0
        %490 = vmatprep.subr.mxu0 0.0
        %491 = vmatpush1.msra.mxu0 0.0
        %492 = vmatprep.subr.mxu0 0.0
        %493 = vmatpush1.msra.mxu0 0.0
        %494 = vmatprep.subr.mxu0 0.0
        %495 = vmatpush1.msra.mxu0 0.0
        %496 = vmatprep.subr.mxu0 0.0
        %497 = vmatpush1.msra.mxu0 0.0
        %498 = vmatprep.subr.mxu0 0.0
        %499 = vmatpush1.msra.mxu0 0.0
        %500 = vmatprep.mubr.f32.mxu0 0.0
        %501 = vmatmul.mubr.f32.gmra.mrb[0].mxu0 %v262
        %v502 = vpop.f32.mrb[0].mxu0
        %v503 = vadd.f32 0.0, %v502
        %v504 = vpop.f32.mrb[0].mxu0
        %v505 = vadd.f32 0.0, %v504
        %506 = vmatprep.mubr.f32.mxu0 0.0
        %507 = vmatmul.mubr.f32.gmra.mrb[0].mxu0 %v265
        %v508 = vpop.f32.mrb[0].mxu0
        %v509 = vadd.f32 0.0, %v508
        %v510 = vpop.f32.mrb[0].mxu0
        %v511 = vadd.f32 0.0, %v510
        %512 = vmatprep.mubr.f32.mxu0 0.0
        %513 = vmatmul.mubr.f32.gmra.mrb[0].mxu0 %v268
        %v514 = vpop.f32.mrb[0].mxu0
        %v515 = vadd.f32 0.0, %v514
        %v516 = vpop.f32.mrb[0].mxu0
        %v517 = vadd.f32 0.0, %v516
        %518 = vdwg.mxu0
        %519 = vmatprep.subr.mxu0 %v203
        %520 = vmatpush1.msra.mxu0 %v202
        %521 = vmatprep.subr.mxu0 %v219
        %522 = vmatpush1.msra.mxu0 %v218
        %523 = vmatprep.subr.mxu0 %v235
        %524 = vmatpush1.msra.mxu0 %v234
        %525 = vmatprep.subr.mxu0 %v251
        %526 = vmatpush1.msra.mxu0 %v250
        %527 = vmatprep.subr.mxu0 0.0
        %528 = vmatpush1.msra.mxu0 0.0
        %529 = vmatprep.subr.mxu0 0.0
        %530 = vmatpush1.msra.mxu0 0.0
        %531 = vmatprep.subr.mxu0 0.0
        %532 = vmatpush1.msra.mxu0 0.0
        %533 = vmatprep.subr.mxu0 0.0
        %534 = vmatpush1.msra.mxu0 0.0
        %535 = vmatprep.subr.mxu0 0.0
        %536 = vmatpush1.msra.mxu0 0.0
        %537 = vmatprep.subr.mxu0 0.0
        %538 = vmatpush1.msra.mxu0 0.0
        %539 = vmatprep.subr.mxu0 0.0
        %540 = vmatpush1.msra.mxu0 0.0
        %541 = vmatprep.subr.mxu0 0.0
        %542 = vmatpush1.msra.mxu0 0.0
        %543 = vmatprep.subr.mxu0 0.0
        %544 = vmatpush1.msra.mxu0 0.0
        %545 = vmatprep.subr.mxu0 0.0
        %546 = vmatpush1.msra.mxu0 0.0
        %547 = vmatprep.subr.mxu0 0.0
        %548 = vmatpush1.msra.mxu0 0.0
        %549 = vmatprep.subr.mxu0 0.0
        %550 = vmatpush1.msra.mxu0 0.0
        %551 = vmatprep.subr.mxu0 0.0
        %552 = vmatpush1.msra.mxu0 0.0
        %553 = vmatprep.subr.mxu0 0.0
        %554 = vmatpush1.msra.mxu0 0.0
        %555 = vmatprep.subr.mxu0 0.0
        %556 = vmatpush1.msra.mxu0 0.0
        %557 = vmatprep.subr.mxu0 0.0
        %558 = vmatpush1.msra.mxu0 0.0
        %559 = vmatprep.subr.mxu0 0.0
        %560 = vmatpush1.msra.mxu0 0.0
        %561 = vmatprep.subr.mxu0 0.0
        %562 = vmatpush1.msra.mxu0 0.0
        %563 = vmatprep.subr.mxu0 0.0
        %564 = vmatpush1.msra.mxu0 0.0
        %565 = vmatprep.subr.mxu0 0.0
        %566 = vmatpush1.msra.mxu0 0.0
        %567 = vmatprep.subr.mxu0 0.0
        %568 = vmatpush1.msra.mxu0 0.0
        %569 = vmatprep.subr.mxu0 0.0
        %570 = vmatpush1.msra.mxu0 0.0
        %571 = vmatprep.subr.mxu0 0.0
        %572 = vmatpush1.msra.mxu0 0.0
        %573 = vmatprep.subr.mxu0 0.0
        %574 = vmatpush1.msra.mxu0 0.0
        %575 = vmatprep.subr.mxu0 0.0
        %576 = vmatpush1.msra.mxu0 0.0
        %577 = vmatprep.subr.mxu0 0.0
        %578 = vmatpush1.msra.mxu0 0.0
        %579 = vmatprep.subr.mxu0 0.0
        %580 = vmatpush1.msra.mxu0 0.0
        %581 = vmatprep.subr.mxu0 0.0
        %582 = vmatpush1.msra.mxu0 0.0
        %583 = vmatprep.mubr.f32.mxu0 0.0
        %584 = vmatmul.mubr.f32.gmra.mrb[0].mxu0 %v262
        %v585 = vpop.f32.mrb[0].mxu0
        %v586 = vadd.f32 0.0, %v585
        %v587 = vpop.f32.mrb[0].mxu0
        %v588 = vadd.f32 0.0, %v587
        %589 = vmatprep.mubr.f32.mxu0 0.0
        %590 = vmatmul.mubr.f32.gmra.mrb[0].mxu0 %v265
        %v591 = vpop.f32.mrb[0].mxu0
        %v592 = vadd.f32 0.0, %v591
        %v593 = vpop.f32.mrb[0].mxu0
        %v594 = vadd.f32 0.0, %v593
        %595 = vmatprep.mubr.f32.mxu0 0.0
        %596 = vmatmul.mubr.f32.gmra.mrb[0].mxu0 %v268
        %v597 = vpop.f32.mrb[0].mxu0
        %v598 = vadd.f32 0.0, %v597
        %v599 = vpop.f32.mrb[0].mxu0
        %v600 = vadd.f32 0.0, %v599
        %601 = vdwg.mxu0
        %602 = vmatprep.subr.mxu0 %v205
        %603 = vmatpush1.msra.mxu0 %v204
        %604 = vmatprep.subr.mxu0 %v221
        %605 = vmatpush1.msra.mxu0 %v220
        %606 = vmatprep.subr.mxu0 %v237
        %607 = vmatpush1.msra.mxu0 %v236
        %608 = vmatprep.subr.mxu0 %v253
        %609 = vmatpush1.msra.mxu0 %v252
        %610 = vmatprep.subr.mxu0 0.0
        %611 = vmatpush1.msra.mxu0 0.0
        %612 = vmatprep.subr.mxu0 0.0
        %613 = vmatpush1.msra.mxu0 0.0
        %614 = vmatprep.subr.mxu0 0.0
        %615 = vmatpush1.msra.mxu0 0.0
        %616 = vmatprep.subr.mxu0 0.0
        %617 = vmatpush1.msra.mxu0 0.0
        %618 = vmatprep.subr.mxu0 0.0
        %619 = vmatpush1.msra.mxu0 0.0
        %620 = vmatprep.subr.mxu0 0.0
        %621 = vmatpush1.msra.mxu0 0.0
        %622 = vmatprep.subr.mxu0 0.0
        %623 = vmatpush1.msra.mxu0 0.0
        %624 = vmatprep.subr.mxu0 0.0
        %625 = vmatpush1.msra.mxu0 0.0
        %626 = vmatprep.subr.mxu0 0.0
        %627 = vmatpush1.msra.mxu0 0.0
        %628 = vmatprep.subr.mxu0 0.0
        %629 = vmatpush1.msra.mxu0 0.0
        %630 = vmatprep.subr.mxu0 0.0
        %631 = vmatpush1.msra.mxu0 0.0
        %632 = vmatprep.subr.mxu0 0.0
        %633 = vmatpush1.msra.mxu0 0.0
        %634 = vmatprep.subr.mxu0 0.0
        %635 = vmatpush1.msra.mxu0 0.0
        %636 = vmatprep.subr.mxu0 0.0
        %637 = vmatpush1.msra.mxu0 0.0
        %638 = vmatprep.subr.mxu0 0.0
        %639 = vmatpush1.msra.mxu0 0.0
        %640 = vmatprep.subr.mxu0 0.0
        %641 = vmatpush1.msra.mxu0 0.0
        %642 = vmatprep.subr.mxu0 0.0
        %643 = vmatpush1.msra.mxu0 0.0
        %644 = vmatprep.subr.mxu0 0.0
        %645 = vmatpush1.msra.mxu0 0.0
        %646 = vmatprep.subr.mxu0 0.0
        %647 = vmatpush1.msra.mxu0 0.0
        %648 = vmatprep.subr.mxu0 0.0
        %649 = vmatpush1.msra.mxu0 0.0
        %650 = vmatprep.subr.mxu0 0.0
        %651 = vmatpush1.msra.mxu0 0.0
        %652 = vmatprep.subr.mxu0 0.0
        %653 = vmatpush1.msra.mxu0 0.0
        %654 = vmatprep.subr.mxu0 0.0
        %655 = vmatpush1.msra.mxu0 0.0
        %656 = vmatprep.subr.mxu0 0.0
        %657 = vmatpush1.msra.mxu0 0.0
        %658 = vmatprep.subr.mxu0 0.0
        %659 = vmatpush1.msra.mxu0 0.0
        %660 = vmatprep.subr.mxu0 0.0
        %661 = vmatpush1.msra.mxu0 0.0
        %662 = vmatprep.subr.mxu0 0.0
        %663 = vmatpush1.msra.mxu0 0.0
        %664 = vmatprep.subr.mxu0 0.0
        %665 = vmatpush1.msra.mxu0 0.0
        %666 = vmatprep.mubr.f32.mxu0 0.0
        %667 = vmatmul.mubr.f32.gmra.mrb[0].mxu0 %v262
        %v668 = vpop.f32.mrb[0].mxu0
        %v669 = vadd.f32 0.0, %v668
        %v670 = vpop.f32.mrb[0].mxu0
        %v671 = vadd.f32 0.0, %v670
        %672 = vmatprep.mubr.f32.mxu0 0.0
        %673 = vmatmul.mubr.f32.gmra.mrb[0].mxu0 %v265
        %v674 = vpop.f32.mrb[0].mxu0
        %v675 = vadd.f32 0.0, %v674
        %v676 = vpop.f32.mrb[0].mxu0
        %v677 = vadd.f32 0.0, %v676
        %678 = vmatprep.mubr.f32.mxu0 0.0
        %679 = vmatmul.mubr.f32.gmra.mrb[0].mxu0 %v268
        %v680 = vpop.f32.mrb[0].mxu0
        %v681 = vadd.f32 0.0, %v680
        %v682 = vpop.f32.mrb[0].mxu0
        %v683 = vadd.f32 0.0, %v682
        %684 = vdwg.mxu0
        %685 = vmatprep.subr.mxu0 %v207
        %686 = vmatpush1.msra.mxu0 %v206
        %687 = vmatprep.subr.mxu0 %v223
        %688 = vmatpush1.msra.mxu0 %v222
        %689 = vmatprep.subr.mxu0 %v239
        %690 = vmatpush1.msra.mxu0 %v238
        %691 = vmatprep.subr.mxu0 %v255
        %692 = vmatpush1.msra.mxu0 %v254
        %693 = vmatprep.subr.mxu0 0.0
        %694 = vmatpush1.msra.mxu0 0.0
        %695 = vmatprep.subr.mxu0 0.0
        %696 = vmatpush1.msra.mxu0 0.0
        %697 = vmatprep.subr.mxu0 0.0
        %698 = vmatpush1.msra.mxu0 0.0
        %699 = vmatprep.subr.mxu0 0.0
        %700 = vmatpush1.msra.mxu0 0.0
        %701 = vmatprep.subr.mxu0 0.0
        %702 = vmatpush1.msra.mxu0 0.0
        %703 = vmatprep.subr.mxu0 0.0
        %704 = vmatpush1.msra.mxu0 0.0
        %705 = vmatprep.subr.mxu0 0.0
        %706 = vmatpush1.msra.mxu0 0.0
        %707 = vmatprep.subr.mxu0 0.0
        %708 = vmatpush1.msra.mxu0 0.0
        %709 = vmatprep.subr.mxu0 0.0
        %710 = vmatpush1.msra.mxu0 0.0
        %711 = vmatprep.subr.mxu0 0.0
        %712 = vmatpush1.msra.mxu0 0.0
        %713 = vmatprep.subr.mxu0 0.0
        %714 = vmatpush1.msra.mxu0 0.0
        %715 = vmatprep.subr.mxu0 0.0
        %716 = vmatpush1.msra.mxu0 0.0
        %717 = vmatprep.subr.mxu0 0.0
        %718 = vmatpush1.msra.mxu0 0.0
        %719 = vmatprep.subr.mxu0 0.0
        %720 = vmatpush1.msra.mxu0 0.0
        %721 = vmatprep.subr.mxu0 0.0
        %722 = vmatpush1.msra.mxu0 0.0
        %723 = vmatprep.subr.mxu0 0.0
        %724 = vmatpush1.msra.mxu0 0.0
        %725 = vmatprep.subr.mxu0 0.0
        %726 = vmatpush1.msra.mxu0 0.0
        %727 = vmatprep.subr.mxu0 0.0
        %728 = vmatpush1.msra.mxu0 0.0
        %729 = vmatprep.subr.mxu0 0.0
        %730 = vmatpush1.msra.mxu0 0.0
        %731 = vmatprep.subr.mxu0 0.0
        %732 = vmatpush1.msra.mxu0 0.0
        %733 = vmatprep.subr.mxu0 0.0
        %734 = vmatpush1.msra.mxu0 0.0
        %735 = vmatprep.subr.mxu0 0.0
        %736 = vmatpush1.msra.mxu0 0.0
        %737 = vmatprep.subr.mxu0 0.0
        %738 = vmatpush1.msra.mxu0 0.0
        %739 = vmatprep.subr.mxu0 0.0
        %740 = vmatpush1.msra.mxu0 0.0
        %741 = vmatprep.subr.mxu0 0.0
        %742 = vmatpush1.msra.mxu0 0.0
        %743 = vmatprep.subr.mxu0 0.0
        %744 = vmatpush1.msra.mxu0 0.0
        %745 = vmatprep.subr.mxu0 0.0
        %746 = vmatpush1.msra.mxu0 0.0
        %747 = vmatprep.subr.mxu0 0.0
        %748 = vmatpush1.msra.mxu0 0.0
        %749 = vmatprep.mubr.f32.mxu0 0.0
        %750 = vmatmul.mubr.f32.gmra.mrb[0].mxu0 %v262
        %v751 = vpop.f32.mrb[0].mxu0
        %v752 = vadd.f32 0.0, %v751
        %v753 = vpop.f32.mrb[0].mxu0
        %v754 = vadd.f32 0.0, %v753
        %755 = vmatprep.mubr.f32.mxu0 0.0
        %756 = vmatmul.mubr.f32.gmra.mrb[0].mxu0 %v265
        %v757 = vpop.f32.mrb[0].mxu0
        %v758 = vadd.f32 0.0, %v757
        %v759 = vpop.f32.mrb[0].mxu0
        %v760 = vadd.f32 0.0, %v759
        %761 = vmatprep.mubr.f32.mxu0 0.0
        %762 = vmatmul.mubr.f32.gmra.mrb[0].mxu0 %v268
        %v763 = vpop.f32.mrb[0].mxu0
        %v764 = vadd.f32 0.0, %v763
        %v765 = vpop.f32.mrb[0].mxu0
        %v766 = vadd.f32 0.0, %v765
        %767 = vdwg.mxu0
        %768 = vmatprep.subr.mxu0 %v209
        %769 = vmatpush1.msra.mxu0 %v208
        %770 = vmatprep.subr.mxu0 %v225
        %771 = vmatpush1.msra.mxu0 %v224
        %772 = vmatprep.subr.mxu0 %v241
        %773 = vmatpush1.msra.mxu0 %v240
        %774 = vmatprep.subr.mxu0 %v257
        %775 = vmatpush1.msra.mxu0 %v256
        %776 = vmatprep.subr.mxu0 0.0
        %777 = vmatpush1.msra.mxu0 0.0
        %778 = vmatprep.subr.mxu0 0.0
        %779 = vmatpush1.msra.mxu0 0.0
        %780 = vmatprep.subr.mxu0 0.0
        %781 = vmatpush1.msra.mxu0 0.0
        %782 = vmatprep.subr.mxu0 0.0
        %783 = vmatpush1.msra.mxu0 0.0
        %784 = vmatprep.subr.mxu0 0.0
        %785 = vmatpush1.msra.mxu0 0.0
        %786 = vmatprep.subr.mxu0 0.0
        %787 = vmatpush1.msra.mxu0 0.0
        %788 = vmatprep.subr.mxu0 0.0
        %789 = vmatpush1.msra.mxu0 0.0
        %790 = vmatprep.subr.mxu0 0.0
        %791 = vmatpush1.msra.mxu0 0.0
        %792 = vmatprep.subr.mxu0 0.0
        %793 = vmatpush1.msra.mxu0 0.0
        %794 = vmatprep.subr.mxu0 0.0
        %795 = vmatpush1.msra.mxu0 0.0
        %796 = vmatprep.subr.mxu0 0.0
        %797 = vmatpush1.msra.mxu0 0.0
        %798 = vmatprep.subr.mxu0 0.0
        %799 = vmatpush1.msra.mxu0 0.0
        %800 = vmatprep.subr.mxu0 0.0
        %801 = vmatpush1.msra.mxu0 0.0
        %802 = vmatprep.subr.mxu0 0.0
        %803 = vmatpush1.msra.mxu0 0.0
        %804 = vmatprep.subr.mxu0 0.0
        %805 = vmatpush1.msra.mxu0 0.0
        %806 = vmatprep.subr.mxu0 0.0
        %807 = vmatpush1.msra.mxu0 0.0
        %808 = vmatprep.subr.mxu0 0.0
        %809 = vmatpush1.msra.mxu0 0.0
        %810 = vmatprep.subr.mxu0 0.0
        %811 = vmatpush1.msra.mxu0 0.0
        %812 = vmatprep.subr.mxu0 0.0
        %813 = vmatpush1.msra.mxu0 0.0
        %814 = vmatprep.subr.mxu0 0.0
        %815 = vmatpush1.msra.mxu0 0.0
        %816 = vmatprep.subr.mxu0 0.0
        %817 = vmatpush1.msra.mxu0 0.0
        %818 = vmatprep.subr.mxu0 0.0
        %819 = vmatpush1.msra.mxu0 0.0
        %820 = vmatprep.subr.mxu0 0.0
        %821 = vmatpush1.msra.mxu0 0.0
        %822 = vmatprep.subr.mxu0 0.0
        %823 = vmatpush1.msra.mxu0 0.0
        %824 = vmatprep.subr.mxu0 0.0
        %825 = vmatpush1.msra.mxu0 0.0
        %826 = vmatprep.subr.mxu0 0.0
        %827 = vmatpush1.msra.mxu0 0.0
        %828 = vmatprep.subr.mxu0 0.0
        %829 = vmatpush1.msra.mxu0 0.0
        %830 = vmatprep.subr.mxu0 0.0
        %831 = vmatpush1.msra.mxu0 0.0
        %832 = vmatprep.mubr.f32.mxu0 0.0
        %833 = vmatmul.mubr.f32.gmra.mrb[0].mxu0 %v262
        %v834 = vpop.f32.mrb[0].mxu0
        %v835 = vadd.f32 0.0, %v834
        %v836 = vpop.f32.mrb[0].mxu0
        %v837 = vadd.f32 0.0, %v836
        %838 = vmatprep.mubr.f32.mxu0 0.0
        %839 = vmatmul.mubr.f32.gmra.mrb[0].mxu0 %v265
        %v840 = vpop.f32.mrb[0].mxu0
        %v841 = vadd.f32 0.0, %v840
        %v842 = vpop.f32.mrb[0].mxu0
        %v843 = vadd.f32 0.0, %v842
        %844 = vmatprep.mubr.f32.mxu0 0.0
        %845 = vmatmul.mubr.f32.gmra.mrb[0].mxu0 %v268
        %v846 = vpop.f32.mrb[0].mxu0
        %v847 = vadd.f32 0.0, %v846
        %v848 = vpop.f32.mrb[0].mxu0
        %v849 = vadd.f32 0.0, %v848
        %850 = vdwg.mxu0
        %851 = vmatprep.subr.mxu0 %v211
        %852 = vmatpush1.msra.mxu0 %v210
        %853 = vmatprep.subr.mxu0 %v227
        %854 = vmatpush1.msra.mxu0 %v226
        %855 = vmatprep.subr.mxu0 %v243
        %856 = vmatpush1.msra.mxu0 %v242
        %857 = vmatprep.subr.mxu0 %v259
        %858 = vmatpush1.msra.mxu0 %v258
        %859 = vmatprep.subr.mxu0 0.0
        %860 = vmatpush1.msra.mxu0 0.0
        %861 = vmatprep.subr.mxu0 0.0
        %862 = vmatpush1.msra.mxu0 0.0
        %863 = vmatprep.subr.mxu0 0.0
        %864 = vmatpush1.msra.mxu0 0.0
        %865 = vmatprep.subr.mxu0 0.0
        %866 = vmatpush1.msra.mxu0 0.0
        %867 = vmatprep.subr.mxu0 0.0
        %868 = vmatpush1.msra.mxu0 0.0
        %869 = vmatprep.subr.mxu0 0.0
        %870 = vmatpush1.msra.mxu0 0.0
        %871 = vmatprep.subr.mxu0 0.0
        %872 = vmatpush1.msra.mxu0 0.0
        %873 = vmatprep.subr.mxu0 0.0
        %874 = vmatpush1.msra.mxu0 0.0
        %875 = vmatprep.subr.mxu0 0.0
        %876 = vmatpush1.msra.mxu0 0.0
        %877 = vmatprep.subr.mxu0 0.0
        %878 = vmatpush1.msra.mxu0 0.0
        %879 = vmatprep.subr.mxu0 0.0
        %880 = vmatpush1.msra.mxu0 0.0
        %881 = vmatprep.subr.mxu0 0.0
        %882 = vmatpush1.msra.mxu0 0.0
        %883 = vmatprep.subr.mxu0 0.0
        %884 = vmatpush1.msra.mxu0 0.0
        %885 = vmatprep.subr.mxu0 0.0
        %886 = vmatpush1.msra.mxu0 0.0
        %887 = vmatprep.subr.mxu0 0.0
        %888 = vmatpush1.msra.mxu0 0.0
        %889 = vmatprep.subr.mxu0 0.0
        %890 = vmatpush1.msra.mxu0 0.0
        %891 = vmatprep.subr.mxu0 0.0
        %892 = vmatpush1.msra.mxu0 0.0
        %893 = vmatprep.subr.mxu0 0.0
        %894 = vmatpush1.msra.mxu0 0.0
        %895 = vmatprep.subr.mxu0 0.0
        %896 = vmatpush1.msra.mxu0 0.0
        %897 = vmatprep.subr.mxu0 0.0
        %898 = vmatpush1.msra.mxu0 0.0
        %899 = vmatprep.subr.mxu0 0.0
        %900 = vmatpush1.msra.mxu0 0.0
        %901 = vmatprep.subr.mxu0 0.0
        %902 = vmatpush1.msra.mxu0 0.0
        %903 = vmatprep.subr.mxu0 0.0
        %904 = vmatpush1.msra.mxu0 0.0
        %905 = vmatprep.subr.mxu0 0.0
        %906 = vmatpush1.msra.mxu0 0.0
        %907 = vmatprep.subr.mxu0 0.0
        %908 = vmatpush1.msra.mxu0 0.0
        %909 = vmatprep.subr.mxu0 0.0
        %910 = vmatpush1.msra.mxu0 0.0
        %911 = vmatprep.subr.mxu0 0.0
        %912 = vmatpush1.msra.mxu0 0.0
        %913 = vmatprep.subr.mxu0 0.0
        %914 = vmatpush1.msra.mxu0 0.0
        %915 = vmatprep.mubr.f32.mxu0 0.0
        %916 = vmatmul.mubr.f32.gmra.mrb[0].mxu0 %v262
        %v917 = vpop.f32.mrb[0].mxu0
        %v918 = vadd.f32 0.0, %v917
        %v919 = vpop.f32.mrb[0].mxu0
        %v920 = vadd.f32 0.0, %v919
        %921 = vmatprep.mubr.f32.mxu0 0.0
        %922 = vmatmul.mubr.f32.gmra.mrb[0].mxu0 %v265
        %v923 = vpop.f32.mrb[0].mxu0
        %v924 = vadd.f32 0.0, %v923
        %v925 = vpop.f32.mrb[0].mxu0
        %v926 = vadd.f32 0.0, %v925
        %927 = vmatprep.mubr.f32.mxu0 0.0
        %928 = vmatmul.mubr.f32.gmra.mrb[0].mxu0 %v268
        %v929 = vpop.f32.mrb[0].mxu0
        %v930 = vadd.f32 0.0, %v929
        %v931 = vpop.f32.mrb[0].mxu0
        %v932 = vadd.f32 0.0, %v931
        %933 = vdwg.mxu0
        %934 = vst [vmem:[%s190] sm:$0xff] %v337
        %935 = vst [vmem:[%s190 + $0x8] sm:$0xff] %v339
        %936 = vst [vmem:[%s190 + $0x10] sm:$0xff] %v420
        %937 = vst [vmem:[%s190 + $0x18] sm:$0xff] %v422
        %938 = vst [vmem:[%s190 + $0x20] sm:$0xff] %v503
        %939 = vst [vmem:[%s190 + $0x28] sm:$0xff] %v505
        %940 = vst [vmem:[%s190 + $0x30] sm:$0xff] %v586
        %941 = vst [vmem:[%s190 + $0x38] sm:$0xff] %v588
        %942 = vst [vmem:[%s190 + $0x40] sm:$0xff] %v669
        %943 = vst [vmem:[%s190 + $0x48] sm:$0xff] %v671
        %944 = vst [vmem:[%s190 + $0x50] sm:$0xff] %v752
        %945 = vst [vmem:[%s190 + $0x58] sm:$0xff] %v754
        %946 = vst [vmem:[%s190 + $0x60] sm:$0xff] %v835
        %947 = vst [vmem:[%s190 + $0x68] sm:$0xff] %v837
        %948 = vst [vmem:[%s190 + $0x70] sm:$0xff] %v918
        %949 = vst [vmem:[%s190 + $0x78] sm:$0xff] %v920
        %950 = vst [vmem:[%s190 + $0x80] sm:$0xff] %v343
        %951 = vst [vmem:[%s190 + $0x88] sm:$0xff] %v345
        %952 = vst [vmem:[%s190 + $0x90] sm:$0xff] %v426
        %953 = vst [vmem:[%s190 + $0x98] sm:$0xff] %v428
        %954 = vst [vmem:[%s190 + $0xa0] sm:$0xff] %v509
        %955 = vst [vmem:[%s190 + $0xa8] sm:$0xff] %v511
        %956 = vst [vmem:[%s190 + $0xb0] sm:$0xff] %v592
        %957 = vst [vmem:[%s190 + $0xb8] sm:$0xff] %v594
        %958 = vst [vmem:[%s190 + $0xc0] sm:$0xff] %v675
        %959 = vst [vmem:[%s190 + $0xc8] sm:$0xff] %v677
        %960 = vst [vmem:[%s190 + $0xd0] sm:$0xff] %v758
        %961 = vst [vmem:[%s190 + $0xd8] sm:$0xff] %v760
        %962 = vst [vmem:[%s190 + $0xe0] sm:$0xff] %v841
        %963 = vst [vmem:[%s190 + $0xe8] sm:$0xff] %v843
        %964 = vst [vmem:[%s190 + $0xf0] sm:$0xff] %v924
        %965 = vst [vmem:[%s190 + $0xf8] sm:$0xff] %v926
        %966 = vst [vmem:[%s190 + $0x100] sm:$0xf] %v349
        %967 = vst [vmem:[%s190 + $0x108] sm:$0xf] %v351
        %968 = vst [vmem:[%s190 + $0x110] sm:$0xf] %v432
        %969 = vst [vmem:[%s190 + $0x118] sm:$0xf] %v434
        %970 = vst [vmem:[%s190 + $0x120] sm:$0xf] %v515
        %971 = vst [vmem:[%s190 + $0x128] sm:$0xf] %v517
        %972 = vst [vmem:[%s190 + $0x130] sm:$0xf] %v598
        %973 = vst [vmem:[%s190 + $0x138] sm:$0xf] %v600
        %974 = vst [vmem:[%s190 + $0x140] sm:$0xf] %v681
        %975 = vst [vmem:[%s190 + $0x148] sm:$0xf] %v683
        %976 = vst [vmem:[%s190 + $0x150] sm:$0xf] %v764
        %977 = vst [vmem:[%s190 + $0x158] sm:$0xf] %v766
        %978 = vst [vmem:[%s190 + $0x160] sm:$0xf] %v847
        %979 = vst [vmem:[%s190 + $0x168] sm:$0xf] %v849
        %980 = vst [vmem:[%s190 + $0x170] sm:$0xf] %v930
        %981 = vst [vmem:[%s190 + $0x178] sm:$0xf] %v932
        %s982 = sand.u32 %s88, 1
        %s983 = sand.u32 %s88, 1
        %s984 = smul.addr %s983, 384
        %s985 = scalar_lea.vmem [#allocation6], %s984
        // Predicated region
        $region37: #{tpu_custom_call.1} parent=27 // pred_check
          %p986 = pneg %p98
        $region38: #{tpu_custom_call.1} parent=27 // pred_check_branch
          %988 = sbr.rel (%p986) target = $region40
        $region39: #{tpu_custom_call.1} parent=27 // pred_region
          %s989 = smul.u32 16, %s22
          %s990 = smul.addr %s21, 768
          %s991 = sadd.s32 %s989, %s990
          %s992 = smul.addr %s991, 8
          %s993 = scalar_lea.vmem %s2, %s992
          // Predicated region
          $region41: #{tpu_custom_call.1} parent=39 // pred_check
            _
          $region42: #{tpu_custom_call.1} parent=39 // pred_check_branch
            %995 = sbr.rel (0) target = $region44
          $region43: #{tpu_custom_call.1} parent=39 // pred_region
            // Predicated region
            $region45: #{tpu_custom_call.1} parent=43 // pred_check
              _
            $region46: #{tpu_custom_call.1} parent=43 // pred_check_branch
              %997 = sbr.rel (0) target = $region48
            $region47: #{tpu_custom_call.1} parent=43 // pred_region
              loop: start=0, step=1, limit=1
              $region49: #{tpu_custom_call.1} parent=47 // loop_pre_header
                _
              $region50: #{tpu_custom_call.1} parent=47 // loop_header
                %s999 = sphi 0, %s1003
                %p1000 = scmp.ge.s32.totalorder %s999, 1
                %s1004 = sphi %s985, %s985
                %s1005 = sphi %s993, %s993
              $region51: #{tpu_custom_call.1} parent=47 // loop_header_branch
                %1002 = sbr.rel (%p1000) target = $region55
              $region52: #{tpu_custom_call.1} parent=47 // loop_body
                %v1006 = vld [vmem:[%s1004] sm:$0xff]
                %1007 = vst [vmem:[%s1005] sm:$0xff] %v1006
                %v1008 = vld [vmem:[%s1004 + $0x8] sm:$0xff]
                %1009 = vst [vmem:[%s1005 + $0x8] sm:$0xff] %v1008
                %v1010 = vld [vmem:[%s1004 + $0x10] sm:$0xff]
                %1011 = vst [vmem:[%s1005 + $0x10] sm:$0xff] %v1010
                %v1012 = vld [vmem:[%s1004 + $0x18] sm:$0xff]
                %1013 = vst [vmem:[%s1005 + $0x18] sm:$0xff] %v1012
                %v1014 = vld [vmem:[%s1004 + $0x20] sm:$0xff]
                %1015 = vst [vmem:[%s1005 + $0x20] sm:$0xff] %v1014
                %v1016 = vld [vmem:[%s1004 + $0x28] sm:$0xff]
                %1017 = vst [vmem:[%s1005 + $0x28] sm:$0xff] %v1016
                %v1018 = vld [vmem:[%s1004 + $0x30] sm:$0xff]
                %1019 = vst [vmem:[%s1005 + $0x30] sm:$0xff] %v1018
                %v1020 = vld [vmem:[%s1004 + $0x38] sm:$0xff]
                %1021 = vst [vmem:[%s1005 + $0x38] sm:$0xff] %v1020
                %v1022 = vld [vmem:[%s1004 + $0x40] sm:$0xff]
                %1023 = vst [vmem:[%s1005 + $0x40] sm:$0xff] %v1022
                %v1024 = vld [vmem:[%s1004 + $0x48] sm:$0xff]
                %1025 = vst [vmem:[%s1005 + $0x48] sm:$0xff] %v1024
                %v1026 = vld [vmem:[%s1004 + $0x50] sm:$0xff]
                %1027 = vst [vmem:[%s1005 + $0x50] sm:$0xff] %v1026
                %v1028 = vld [vmem:[%s1004 + $0x58] sm:$0xff]
                %1029 = vst [vmem:[%s1005 + $0x58] sm:$0xff] %v1028
                %v1030 = vld [vmem:[%s1004 + $0x60] sm:$0xff]
                %1031 = vst [vmem:[%s1005 + $0x60] sm:$0xff] %v1030
                %v1032 = vld [vmem:[%s1004 + $0x68] sm:$0xff]
                %1033 = vst [vmem:[%s1005 + $0x68] sm:$0xff] %v1032
                %v1034 = vld [vmem:[%s1004 + $0x70] sm:$0xff]
                %1035 = vst [vmem:[%s1005 + $0x70] sm:$0xff] %v1034
                %v1036 = vld [vmem:[%s1004 + $0x78] sm:$0xff]
                %1037 = vst [vmem:[%s1005 + $0x78] sm:$0xff] %v1036
                %v1038 = vld [vmem:[%s1004 + $0x80] sm:$0xff]
                %1039 = vst [vmem:[%s1005 + $0x800] sm:$0xff] %v1038
                %v1040 = vld [vmem:[%s1004 + $0x88] sm:$0xff]
                %1041 = vst [vmem:[%s1005 + $0x808] sm:$0xff] %v1040
                %v1042 = vld [vmem:[%s1004 + $0x90] sm:$0xff]
                %1043 = vst [vmem:[%s1005 + $0x810] sm:$0xff] %v1042
                %v1044 = vld [vmem:[%s1004 + $0x98] sm:$0xff]
                %1045 = vst [vmem:[%s1005 + $0x818] sm:$0xff] %v1044
                %v1046 = vld [vmem:[%s1004 + $0xa0] sm:$0xff]
                %1047 = vst [vmem:[%s1005 + $0x820] sm:$0xff] %v1046
                %v1048 = vld [vmem:[%s1004 + $0xa8] sm:$0xff]
                %1049 = vst [vmem:[%s1005 + $0x828] sm:$0xff] %v1048
                %v1050 = vld [vmem:[%s1004 + $0xb0] sm:$0xff]
                %1051 = vst [vmem:[%s1005 + $0x830] sm:$0xff] %v1050
                %v1052 = vld [vmem:[%s1004 + $0xb8] sm:$0xff]
                %1053 = vst [vmem:[%s1005 + $0x838] sm:$0xff] %v1052
                %v1054 = vld [vmem:[%s1004 + $0xc0] sm:$0xff]
                %1055 = vst [vmem:[%s1005 + $0x840] sm:$0xff] %v1054
                %v1056 = vld [vmem:[%s1004 + $0xc8] sm:$0xff]
                %1057 = vst [vmem:[%s1005 + $0x848] sm:$0xff] %v1056
                %v1058 = vld [vmem:[%s1004 + $0xd0] sm:$0xff]
                %1059 = vst [vmem:[%s1005 + $0x850] sm:$0xff] %v1058
                %v1060 = vld [vmem:[%s1004 + $0xd8] sm:$0xff]
                %1061 = vst [vmem:[%s1005 + $0x858] sm:$0xff] %v1060
                %v1062 = vld [vmem:[%s1004 + $0xe0] sm:$0xff]
                %1063 = vst [vmem:[%s1005 + $0x860] sm:$0xff] %v1062
                %v1064 = vld [vmem:[%s1004 + $0xe8] sm:$0xff]
                %1065 = vst [vmem:[%s1005 + $0x868] sm:$0xff] %v1064
                %v1066 = vld [vmem:[%s1004 + $0xf0] sm:$0xff]
                %1067 = vst [vmem:[%s1005 + $0x870] sm:$0xff] %v1066
                %v1068 = vld [vmem:[%s1004 + $0xf8] sm:$0xff]
                %1069 = vst [vmem:[%s1005 + $0x878] sm:$0xff] %v1068
                %v1070 = vld [vmem:[%s1004 + $0x100] sm:$0xff]
                %1071 = vst [vmem:[%s1005 + $0x1000] sm:$0xff] %v1070
                %v1072 = vld [vmem:[%s1004 + $0x108] sm:$0xff]
                %1073 = vst [vmem:[%s1005 + $0x1008] sm:$0xff] %v1072
                %v1074 = vld [vmem:[%s1004 + $0x110] sm:$0xff]
                %1075 = vst [vmem:[%s1005 + $0x1010] sm:$0xff] %v1074
                %v1076 = vld [vmem:[%s1004 + $0x118] sm:$0xff]
                %1077 = vst [vmem:[%s1005 + $0x1018] sm:$0xff] %v1076
                %v1078 = vld [vmem:[%s1004 + $0x120] sm:$0xff]
                %1079 = vst [vmem:[%s1005 + $0x1020] sm:$0xff] %v1078
                %v1080 = vld [vmem:[%s1004 + $0x128] sm:$0xff]
                %1081 = vst [vmem:[%s1005 + $0x1028] sm:$0xff] %v1080
                %v1082 = vld [vmem:[%s1004 + $0x130] sm:$0xff]
                %1083 = vst [vmem:[%s1005 + $0x1030] sm:$0xff] %v1082
                %v1084 = vld [vmem:[%s1004 + $0x138] sm:$0xff]
                %1085 = vst [vmem:[%s1005 + $0x1038] sm:$0xff] %v1084
                %v1086 = vld [vmem:[%s1004 + $0x140] sm:$0xff]
                %1087 = vst [vmem:[%s1005 + $0x1040] sm:$0xff] %v1086
                %v1088 = vld [vmem:[%s1004 + $0x148] sm:$0xff]
                %1089 = vst [vmem:[%s1005 + $0x1048] sm:$0xff] %v1088
                %v1090 = vld [vmem:[%s1004 + $0x150] sm:$0xff]
                %1091 = vst [vmem:[%s1005 + $0x1050] sm:$0xff] %v1090
                %v1092 = vld [vmem:[%s1004 + $0x158] sm:$0xff]
                %1093 = vst [vmem:[%s1005 + $0x1058] sm:$0xff] %v1092
                %v1094 = vld [vmem:[%s1004 + $0x160] sm:$0xff]
                %1095 = vst [vmem:[%s1005 + $0x1060] sm:$0xff] %v1094
                %v1096 = vld [vmem:[%s1004 + $0x168] sm:$0xff]
                %1097 = vst [vmem:[%s1005 + $0x1068] sm:$0xff] %v1096
                %v1098 = vld [vmem:[%s1004 + $0x170] sm:$0xff]
                %1099 = vst [vmem:[%s1005 + $0x1070] sm:$0xff] %v1098
                %v1100 = vld [vmem:[%s1004 + $0x178] sm:$0xff]
                %1101 = vst [vmem:[%s1005 + $0x1078] sm:$0xff] %v1100
              $region53: #{tpu_custom_call.1} parent=47 // loop_footer
                %s1003 = sadd.s32 1, %s999
              $region54: #{tpu_custom_call.1} parent=47 // loop_footer_branch
                %998 = sbr.rel target = $region50
              $region55: #{tpu_custom_call.1} parent=47 // loop_exit
                _
            $region48: #{tpu_custom_call.1} parent=43 // pred_fallthru
              _
            // Predicated region
            $region56: #{tpu_custom_call.1} parent=43 // pred_check
              _
            $region57: #{tpu_custom_call.1} parent=43 // pred_check_branch
              %1103 = sbr.rel target = $region59
            $region58: #{tpu_custom_call.1} parent=43 // pred_region
              _
            $region59: #{tpu_custom_call.1} parent=43 // pred_fallthru
              _
          $region44: #{tpu_custom_call.1} parent=39 // pred_fallthru
            _
          %1104 = vnop
        $region40: #{tpu_custom_call.1} parent=27 // pred_fallthru
          _
      $region28: #{tpu_custom_call.1} parent=5 // pred_fallthru
        _
      %p1105 = scmp.le.s32.totalorder 2, %s12
      // Predicated region
      $region60: #{tpu_custom_call.1} parent=5 // pred_check
        %p1106 = pneg %p1105
      $region61: #{tpu_custom_call.1} parent=5 // pred_check_branch
        %1108 = sbr.rel (%p1106) target = $region63
      $region62: #{tpu_custom_call.1} parent=5 // pred_region
        %s1109 = ssub.s32 %s12, 2
        // Predicated region
        $region64: #{tpu_custom_call.1} parent=62 // pred_check
          %p1110 = pneg %p104
        $region65: #{tpu_custom_call.1} parent=62 // pred_check_branch
          %1112 = sbr.rel (%p1110) target = $region67
        $region66: #{tpu_custom_call.1} parent=62 // pred_region
          %s1113 = sand.u32 %s89, 1
          %s1114 = sand.u32 %s89, 1
          %s1115 = smul.addr %s1114, 384
          %s1116 = scalar_lea.vmem [#allocation6], %s1115
        $region67: #{tpu_custom_call.1} parent=62 // pred_fallthru
          _
      $region63: #{tpu_custom_call.1} parent=5 // pred_fallthru
        _
    $region6: #{tpu_custom_call.1} parent=1 // loop_footer
      %s16 = sadd.s32 1, %s12
    $region7: #{tpu_custom_call.1} parent=1 // loop_footer_branch
      %11 = sbr.rel target = $region3
    $region8: #{tpu_custom_call.1} parent=1 // loop_exit
      _
    %1117 = vsyncpa [#allocation3], 1
    %s1118 = scalar_lea.sflag [#allocation3], 1
    %1119 = vsyncpa %s1118, 1
    %1120 = vsyncpa [#allocation5], 1
    %s1121 = scalar_lea.sflag [#allocation5], 1
    %1122 = vsyncpa %s1121, 1

</llo_original>
